<compile_context>
chip_gen: v7x
topology: tpu7x:2x2x1
jax: 0.10.0
libtpu: 0.0.40
codegen_flags: <defaults>
</compile_context>

<pallas_src>
import jax
import jax.numpy as jnp
from jax.experimental import pallas as pl
from jax.experimental.pallas import tpu as pltpu

IN_FEATURES = 16 * 5 * 5   # 400
OUT_FEATURES = 10


def linear_sub_kernel(x_ref, w_ref, b_ref, o_ref):
    # x_ref : VMEM (TM, 400)
    # w_ref : VMEM (400, 10)   -- pre-transposed in the wrapper (K, N)
    # b_ref : VMEM (1, 10)     -- bias with `other` already folded in
    # o_ref : VMEM (TM, 10)
    acc = jnp.dot(x_ref[...], w_ref[...], preferred_element_type=jnp.float32)
    o_ref[...] = (acc + b_ref[...]).astype(o_ref.dtype)


def _round_up(v, m):
    return ((v + m - 1) // m) * m


def model_forward(x, weight, bias, other, *, tm=2048):
    """x: (B, 400) f32; weight: (10, 400) f32 (native PyTorch layout);
    bias: (10,); other: scalar.  Returns (B, 10) f32 = Linear(x) - other."""
    B, K = x.shape
    N = weight.shape[0]

    # One-time layout prep (trace-time / tiny XLA ops, negligible):
    #  - transpose weight to (K, N) so the kernel is a plain MXU matmul,
    #  - fold the constant subtraction into the bias.
    w_kn = jnp.transpose(weight.astype(jnp.float32))            # (400, 10)
    b2d = (bias.astype(jnp.float32) - jnp.float32(other)).reshape(1, N)

    # Batch tiling:
    #  * tiny batch -> single full block (tiling cannot help; launch-dominated).
    #  * otherwise  -> at least 2 grid steps (v7x megacore sharding) with a
    #    sublane-aligned tile, capped at `tm` (2048 keeps double-buffered VMEM
    #    ~10 MiB, under v5e's 16 MiB default scoped limit).
    if B <= 16:
        TM = B
    else:
        TM = min(tm, max(8, _round_up(pl.cdiv(B, 2), 8)))
    grid = (pl.cdiv(B, TM),)

    return pl.pallas_call(
        linear_sub_kernel,
        out_shape=jax.ShapeDtypeStruct((B, N), jnp.float32),
        grid=grid,
        in_specs=[
            pl.BlockSpec((TM, K), lambda i: (i, 0)),   # x tile (lane-dense, K=400)
            pl.BlockSpec((K, N), lambda i: (0, 0)),    # weight (400, 10), resident
            pl.BlockSpec((1, N), lambda i: (0, 0)),    # bias (other folded in)
        ],
        out_specs=pl.BlockSpec((TM, N), lambda i: (i, 0)),
        compiler_params=pltpu.CompilerParams(
            dimension_semantics=("parallel",)),        # shard batch across TCs on v7x
    )(x, w_kn, b2d)


if __name__ == "__main__":
    key = jax.random.PRNGKey(0)
    kx, kw, kb, kx2 = jax.random.split(key, 4)

    bound = 1.0 / (IN_FEATURES ** 0.5)
    weight = jax.random.uniform(kw, (OUT_FEATURES, IN_FEATURES),
                                minval=-bound, maxval=bound, dtype=jnp.float32)
    bias = jax.random.uniform(kb, (OUT_FEATURES,),
                              minval=-bound, maxval=bound, dtype=jnp.float32)
    other = 0.5  # the module's `self.other` constant

    # Small batch (single-block path, matches the module's B=1-ish usage).
    B = 8
    x = jax.random.normal(kx, (B, IN_FEATURES), dtype=jnp.float32)
    out = model_forward(x, weight, bias, other)
    jax.block_until_ready(out)
    ref = x @ weight.T + bias - other
    assert out.shape == (B, OUT_FEATURES)
    assert jnp.allclose(out, ref, atol=1e-4, rtol=1e-4)

    # Larger batch exercising the multi-step grid (>=2 tiles + partial tail).
    B2 = 1000
    x2 = jax.random.normal(kx2, (B2, IN_FEATURES), dtype=jnp.float32)
    out2 = model_forward(x2, weight, bias, other)
    jax.block_until_ready(out2)
    ref2 = x2 @ weight.T + bias - other
    assert out2.shape == (B2, OUT_FEATURES)
    assert jnp.allclose(out2, ref2, atol=1e-4, rtol=1e-4)

    print("KERNEL_OK")
</pallas_src>

<mosaic_0001>
module attributes {stable_mosaic.version = 11 : i64} {
  func.func @linear_sub_kernel(%arg0: i32, %arg1: memref<8x400xf32, #tpu.memory_space<vmem>>, %arg2: memref<400x10xf32, #tpu.memory_space<vmem>>, %arg3: memref<1x10xf32, #tpu.memory_space<vmem>>, %arg4: memref<8x10xf32, #tpu.memory_space<vmem>>) attributes {dimension_semantics = [#tpu.dimension_semantics<parallel>], iteration_bounds = array<i64: 1>, scalar_prefetch = 0 : i64, scratch_operands = 0 : i64, tpu.core_type = #tpu.core_type<tc>, window_params = [{transform_indices = @transform_0, window_bounds = array<i64: 8, 400>}, {pipeline_mode = #tpu.pipeline_mode<synchronous>, transform_indices = @transform_1, window_bounds = array<i64: 400, 10>}, {pipeline_mode = #tpu.pipeline_mode<synchronous>, transform_indices = @transform_2, window_bounds = array<i64: 1, 10>}, {transform_indices = @transform_3, window_bounds = array<i64: 8, 10>}]} {
    %c0 = arith.constant 0 : index
    %c0_0 = arith.constant 0 : index
    %0 = vector.load %arg1[%c0, %c0_0] : memref<8x400xf32, #tpu.memory_space<vmem>>, vector<8x400xf32>
    %c0_1 = arith.constant 0 : index
    %c0_2 = arith.constant 0 : index
    %1 = vector.load %arg2[%c0_1, %c0_2] : memref<400x10xf32, #tpu.memory_space<vmem>>, vector<400x10xf32>
    %cst = arith.constant dense<0.000000e+00> : vector<8x10xf32>
    %2 = tpu.matmul %0, %1, %cst {dimension_numbers = #tpu.dot_dimension_numbers<[1], [0], [0], [1], [0, 0, 1, 1], [], []>} : vector<8x400xf32>, vector<400x10xf32>, vector<8x10xf32> -> vector<8x10xf32>
    %c0_3 = arith.constant 0 : index
    %c0_4 = arith.constant 0 : index
    %3 = vector.load %arg3[%c0_3, %c0_4] : memref<1x10xf32, #tpu.memory_space<vmem>>, vector<1x10xf32>
    %4 = vector.broadcast %3 : vector<1x10xf32> to vector<8x10xf32>
    %5 = arith.addf %2, %4 : vector<8x10xf32>
    %c0_5 = arith.constant 0 : index
    %c0_6 = arith.constant 0 : index
    %6 = vector.load %arg4[%c0_5, %c0_6] : memref<8x10xf32, #tpu.memory_space<vmem>>, vector<8x10xf32>
    tpu.vector_store %arg4[%c0_5, %c0_6], %5 {strides = array<i32>} : memref<8x10xf32, #tpu.memory_space<vmem>>, vector<8x10xf32>,
    return
  }
  func.func @transform_0(%arg0: i32) -> (i32, i32) {
    %c0_i32 = arith.constant 0 : i32
    %c0_i32_0 = arith.constant 0 : i32
    return %arg0, %c0_i32 : i32, i32
  }
  func.func @transform_1(%arg0: i32) -> (i32, i32) {
    %c0_i32 = arith.constant 0 : i32
    %c0_i32_0 = arith.constant 0 : i32
    %c0_i32_1 = arith.constant 0 : i32
    return %c0_i32, %c0_i32_0 : i32, i32
  }
  func.func @transform_2(%arg0: i32) -> (i32, i32) {
    %c0_i32 = arith.constant 0 : i32
    %c0_i32_0 = arith.constant 0 : i32
    %c0_i32_1 = arith.constant 0 : i32
    return %c0_i32, %c0_i32_0 : i32, i32
  }
  func.func @transform_3(%arg0: i32) -> (i32, i32) {
    %c0_i32 = arith.constant 0 : i32
    %c0_i32_0 = arith.constant 0 : i32
    return %arg0, %c0_i32 : i32, i32
  }
}

</mosaic_0001>

<llo_original>
// kernel: tpu_custom_call.1
$region0: #{tpu_custom_call.1}
  #allocation0 [shape = 'u32[]', space=smem, size = 0x4, offset = 0x4, fixed_abs, tag = 'smem constant byte address 0x4 - core index']
  #allocation1 [shape = 'u32[144,128]{1,0:T(1,128)}', space=vmem, size = 0x12000, scoped, tag = 'internal scratch']
  %s0 = inlined_call_operand.vmem [shape: f32[8,400], index: 0, kind: input, shape index: {}]
  %s1 = inlined_call_operand.vmem [shape: f32[400,10], index: 1, kind: input, shape index: {}]
  %s2 = inlined_call_operand.vmem [shape: f32[1,10], index: 2, kind: input, shape index: {}]
  %s3 = inlined_call_operand.hbm [shape: f32[8,10], index: 3, kind: output, shape index: {}]
  %s4 = sld [smem:[#allocation0]]
  $region22: #{tpu_custom_call.1} parent=0
    _
  %s6 = ssub.s32 1, %s4
  %s7 = scalar_select 0, %s6, %s4
  $region1: #{tpu_custom_call.1} parent=0
    #allocation2 [shape = 'u8[4096]{0}', space=vmem, size = 0x1000, scoped, tag = 'output window, operand 0, single buffered']
    #allocation3 [shape = 's32[1]{0}', space=sflag, size = 0x4, scoped, tag = 'scoped memory for tpu_custom_call.1']
    %8 = vsyncpa [#allocation3], 0
    // Predicated region
    $region2: #{tpu_custom_call.1} parent=1 // pred_check
      _
    $region3: #{tpu_custom_call.1} parent=1 // pred_check_branch
      %10 = sbr.rel (0) target = $region5
    $region4: #{tpu_custom_call.1} parent=1 // pred_region
      _
    $region5: #{tpu_custom_call.1} parent=1 // pred_fallthru
      _
    // Predicated region
    $region6: #{tpu_custom_call.1} parent=1 // pred_check
      _
    $region7: #{tpu_custom_call.1} parent=1 // pred_check_branch
      %12 = sbr.rel (0) target = $region9
    $region8: #{tpu_custom_call.1} parent=1 // pred_region
      _
    $region9: #{tpu_custom_call.1} parent=1 // pred_fallthru
      _
    // Predicated region
    $region10: #{tpu_custom_call.1} parent=1 // pred_check
      _
    $region11: #{tpu_custom_call.1} parent=1 // pred_check_branch
      %14 = sbr.rel (0) target = $region13
    $region12: #{tpu_custom_call.1} parent=1 // pred_region
      _
    $region13: #{tpu_custom_call.1} parent=1 // pred_fallthru
      _
    %v15 = vld [vmem:[%s0] sm:$0xff]
    %v16 = vld [vmem:[%s0 + $0x8] sm:$0xff]
    %v17 = vld [vmem:[%s0 + $0x10] sm:$0xff]
    %v18 = vld [vmem:[%s0 + $0x18] sm:$0xff]
    %v19 = vld [vmem:[%s1] sm:$0xff]
    %v20 = vld [vmem:[%s1 + $0x8] sm:$0xff]
    %v21 = vld [vmem:[%s1 + $0x10] sm:$0xff]
    %v22 = vld [vmem:[%s1 + $0x18] sm:$0xff]
    %v23 = vld [vmem:[%s1 + $0x20] sm:$0xff]
    %v24 = vld [vmem:[%s1 + $0x28] sm:$0xff]
    %v25 = vld [vmem:[%s1 + $0x30] sm:$0xff]
    %v26 = vld [vmem:[%s1 + $0x38] sm:$0xff]
    %v27 = vld [vmem:[%s1 + $0x40] sm:$0xff]
    %v28 = vld [vmem:[%s1 + $0x48] sm:$0xff]
    %v29 = vld [vmem:[%s1 + $0x50] sm:$0xff]
    %v30 = vld [vmem:[%s1 + $0x58] sm:$0xff]
    %v31 = vld [vmem:[%s1 + $0x60] sm:$0xff]
    %v32 = vld [vmem:[%s1 + $0x68] sm:$0xff]
    %v33 = vld [vmem:[%s1 + $0x70] sm:$0xff]
    %v34 = vld [vmem:[%s1 + $0x78] sm:$0xff]
    %v35 = vld [vmem:[%s1 + $0x80] sm:$0xff]
    %v36 = vld [vmem:[%s1 + $0x88] sm:$0xff]
    %v37 = vld [vmem:[%s1 + $0x90] sm:$0xff]
    %v38 = vld [vmem:[%s1 + $0x98] sm:$0xff]
    %v39 = vld [vmem:[%s1 + $0xa0] sm:$0xff]
    %v40 = vld [vmem:[%s1 + $0xa8] sm:$0xff]
    %v41 = vld [vmem:[%s1 + $0xb0] sm:$0xff]
    %v42 = vld [vmem:[%s1 + $0xb8] sm:$0xff]
    %v43 = vld [vmem:[%s1 + $0xc0] sm:$0xff]
    %v44 = vld [vmem:[%s1 + $0xc8] sm:$0xff]
    %v45 = vld [vmem:[%s1 + $0xd0] sm:$0xff]
    %v46 = vld [vmem:[%s1 + $0xd8] sm:$0xff]
    %v47 = vld [vmem:[%s1 + $0xe0] sm:$0xff]
    %v48 = vld [vmem:[%s1 + $0xe8] sm:$0xff]
    %v49 = vld [vmem:[%s1 + $0xf0] sm:$0xff]
    %v50 = vld [vmem:[%s1 + $0xf8] sm:$0xff]
    %v51 = vld [vmem:[%s1 + $0x100] sm:$0xff]
    %v52 = vld [vmem:[%s1 + $0x108] sm:$0xff]
    %v53 = vld [vmem:[%s1 + $0x110] sm:$0xff]
    %v54 = vld [vmem:[%s1 + $0x118] sm:$0xff]
    %v55 = vld [vmem:[%s1 + $0x120] sm:$0xff]
    %v56 = vld [vmem:[%s1 + $0x128] sm:$0xff]
    %v57 = vld [vmem:[%s1 + $0x130] sm:$0xff]
    %v58 = vld [vmem:[%s1 + $0x138] sm:$0xff]
    %v59 = vld [vmem:[%s1 + $0x140] sm:$0xff]
    %v60 = vld [vmem:[%s1 + $0x148] sm:$0xff]
    %v61 = vld [vmem:[%s1 + $0x150] sm:$0xff]
    %v62 = vld [vmem:[%s1 + $0x158] sm:$0xff]
    %v63 = vld [vmem:[%s1 + $0x160] sm:$0xff]
    %v64 = vld [vmem:[%s1 + $0x168] sm:$0xff]
    %v65 = vld [vmem:[%s1 + $0x170] sm:$0xff]
    %v66 = vld [vmem:[%s1 + $0x178] sm:$0xff]
    %v67 = vld [vmem:[%s1 + $0x180] sm:$0xff]
    %v68 = vld [vmem:[%s1 + $0x188] sm:$0xff]
    %v69 = vld [vmem:[%s2] sm:$0x1]
    %v71 = vlaneseq
    %v72 = vshrl.u32 %v71, 7
    %v73 = vsub.s32 0, %v72
    %v74 = vrot.slane %v69, %v73
    %vm76 = vcmask 130048
    %v78 = vsel %vm76, %v18, 0
    %80 = vmatprep.subr.mxu0 0.0
    %81 = vmatpush1.msra.mxu0 %v19
    %82 = vmatprep.subr.mxu0 0.0
    %83 = vmatpush1.msra.mxu0 %v20
    %84 = vmatprep.subr.mxu0 0.0
    %85 = vmatpush1.msra.mxu0 %v21
    %86 = vmatprep.subr.mxu0 0.0
    %87 = vmatpush1.msra.mxu0 %v22
    %88 = vmatprep.subr.mxu0 0.0
    %89 = vmatpush1.msra.mxu0 %v23
    %90 = vmatprep.subr.mxu0 0.0
    %91 = vmatpush1.msra.mxu0 %v24
    %92 = vmatprep.subr.mxu0 0.0
    %93 = vmatpush1.msra.mxu0 %v25
    %94 = vmatprep.subr.mxu0 0.0
    %95 = vmatpush1.msra.mxu0 %v26
    %96 = vmatprep.subr.mxu0 0.0
    %97 = vmatpush1.msra.mxu0 %v27
    %98 = vmatprep.subr.mxu0 0.0
    %99 = vmatpush1.msra.mxu0 %v28
    %100 = vmatprep.subr.mxu0 0.0
    %101 = vmatpush1.msra.mxu0 %v29
    %102 = vmatprep.subr.mxu0 0.0
    %103 = vmatpush1.msra.mxu0 %v30
    %104 = vmatprep.subr.mxu0 0.0
    %105 = vmatpush1.msra.mxu0 %v31
    %106 = vmatprep.subr.mxu0 0.0
    %107 = vmatpush1.msra.mxu0 %v32
    %108 = vmatprep.subr.mxu0 0.0
    %109 = vmatpush1.msra.mxu0 %v33
    %110 = vmatprep.subr.mxu0 0.0
    %111 = vmatpush1.msra.mxu0 %v34
    %112 = vmatprep.subr.mxu0 0.0
    %113 = vmatpush1.msra.mxu0 %v35
    %114 = vmatprep.subr.mxu0 0.0
    %115 = vmatpush1.msra.mxu0 %v36
    %116 = vmatprep.subr.mxu0 0.0
    %117 = vmatpush1.msra.mxu0 %v37
    %118 = vmatprep.subr.mxu0 0.0
    %119 = vmatpush1.msra.mxu0 %v38
    %120 = vmatprep.subr.mxu0 0.0
    %121 = vmatpush1.msra.mxu0 %v39
    %122 = vmatprep.subr.mxu0 0.0
    %123 = vmatpush1.msra.mxu0 %v40
    %124 = vmatprep.subr.mxu0 0.0
    %125 = vmatpush1.msra.mxu0 %v41
    %126 = vmatprep.subr.mxu0 0.0
    %127 = vmatpush1.msra.mxu0 %v42
    %128 = vmatprep.subr.mxu0 0.0
    %129 = vmatpush1.msra.mxu0 %v43
    %130 = vmatprep.subr.mxu0 0.0
    %131 = vmatpush1.msra.mxu0 %v44
    %132 = vmatprep.subr.mxu0 0.0
    %133 = vmatpush1.msra.mxu0 %v45
    %134 = vmatprep.subr.mxu0 0.0
    %135 = vmatpush1.msra.mxu0 %v46
    %136 = vmatprep.subr.mxu0 0.0
    %137 = vmatpush1.msra.mxu0 %v47
    %138 = vmatprep.subr.mxu0 0.0
    %139 = vmatpush1.msra.mxu0 %v48
    %140 = vmatprep.subr.mxu0 0.0
    %141 = vmatpush1.msra.mxu0 %v49
    %142 = vmatprep.subr.mxu0 0.0
    %143 = vmatpush1.msra.mxu0 %v50
    %144 = vmatprep.mubr.f32.mxu0 %v16
    %145 = vmatmul.mubr.f32.gmra.mrb[0].mxu0 %v15
    %v146 = vpop.f32.mrb[0].mxu0
    %v147 = vadd.f32 %v74, %v146
    %v148 = vpop.f32.mrb[0].mxu0
    %149 = vdwg.mxu0
    %150 = vmatprep.subr.mxu0 0.0
    %151 = vmatpush1.msra.mxu0 %v51
    %152 = vmatprep.subr.mxu0 0.0
    %153 = vmatpush1.msra.mxu0 %v52
    %154 = vmatprep.subr.mxu0 0.0
    %155 = vmatpush1.msra.mxu0 %v53
    %156 = vmatprep.subr.mxu0 0.0
    %157 = vmatpush1.msra.mxu0 %v54
    %158 = vmatprep.subr.mxu0 0.0
    %159 = vmatpush1.msra.mxu0 %v55
    %160 = vmatprep.subr.mxu0 0.0
    %161 = vmatpush1.msra.mxu0 %v56
    %162 = vmatprep.subr.mxu0 0.0
    %163 = vmatpush1.msra.mxu0 %v57
    %164 = vmatprep.subr.mxu0 0.0
    %165 = vmatpush1.msra.mxu0 %v58
    %166 = vmatprep.subr.mxu0 0.0
    %167 = vmatpush1.msra.mxu0 %v59
    %168 = vmatprep.subr.mxu0 0.0
    %169 = vmatpush1.msra.mxu0 %v60
    %170 = vmatprep.subr.mxu0 0.0
    %171 = vmatpush1.msra.mxu0 %v61
    %172 = vmatprep.subr.mxu0 0.0
    %173 = vmatpush1.msra.mxu0 %v62
    %174 = vmatprep.subr.mxu0 0.0
    %175 = vmatpush1.msra.mxu0 %v63
    %176 = vmatprep.subr.mxu0 0.0
    %177 = vmatpush1.msra.mxu0 %v64
    %178 = vmatprep.subr.mxu0 0.0
    %179 = vmatpush1.msra.mxu0 %v65
    %180 = vmatprep.subr.mxu0 0.0
    %181 = vmatpush1.msra.mxu0 %v66
    %182 = vmatprep.subr.mxu0 0.0
    %183 = vmatpush1.msra.mxu0 %v67
    %184 = vmatprep.subr.mxu0 0.0
    %185 = vmatpush1.msra.mxu0 %v68
    %186 = vmatprep.subr.mxu0 0.0
    %187 = vmatpush1.msra.mxu0 0.0
    %188 = vmatprep.subr.mxu0 0.0
    %189 = vmatpush1.msra.mxu0 0.0
    %190 = vmatprep.subr.mxu0 0.0
    %191 = vmatpush1.msra.mxu0 0.0
    %192 = vmatprep.subr.mxu0 0.0
    %193 = vmatpush1.msra.mxu0 0.0
    %194 = vmatprep.subr.mxu0 0.0
    %195 = vmatpush1.msra.mxu0 0.0
    %196 = vmatprep.subr.mxu0 0.0
    %197 = vmatpush1.msra.mxu0 0.0
    %198 = vmatprep.subr.mxu0 0.0
    %199 = vmatpush1.msra.mxu0 0.0
    %200 = vmatprep.subr.mxu0 0.0
    %201 = vmatpush1.msra.mxu0 0.0
    %202 = vmatprep.subr.mxu0 0.0
    %203 = vmatpush1.msra.mxu0 0.0
    %204 = vmatprep.subr.mxu0 0.0
    %205 = vmatpush1.msra.mxu0 0.0
    %206 = vmatprep.subr.mxu0 0.0
    %207 = vmatpush1.msra.mxu0 0.0
    %208 = vmatprep.subr.mxu0 0.0
    %209 = vmatpush1.msra.mxu0 0.0
    %210 = vmatprep.subr.mxu0 0.0
    %211 = vmatpush1.msra.mxu0 0.0
    %212 = vmatprep.subr.mxu0 0.0
    %213 = vmatpush1.msra.mxu0 0.0
    %214 = vmatprep.mubr.f32.mxu0 %v78
    %215 = vmatmul.mubr.f32.gmra.mrb[0].mxu0 %v17
    %v216 = vpop.f32.mrb[0].mxu0
    %v217 = vadd.f32 %v147, %v216
    %v218 = vpop.f32.mrb[0].mxu0
    %219 = vdwg.mxu0
    %vm220 = vcmask 80896
    %221 = vst.msk [vmem:[#allocation2] sm:$0xff] %vm220, %v217
    // Predicated region
    $region14: #{tpu_custom_call.1} parent=1 // pred_check
      _
    $region15: #{tpu_custom_call.1} parent=1 // pred_check_branch
      %223 = sbr.rel (0) target = $region17
    $region16: #{tpu_custom_call.1} parent=1 // pred_region
      %s225 = ssub.s32 128, 128
      %226 = vsyncadd [#allocation3], %s225
      %s228 = sshll.u32 [#allocation2], 4
      %s229 = int_to_ptr.vmem [resolvable:$true] %s228
      %231 = dma.vmem_to_hbm [thread:$0]  %s229, 128, %s3, [#allocation3]
    $region17: #{tpu_custom_call.1} parent=1 // pred_fallthru
      _
    // Predicated region
    $region18: #{tpu_custom_call.1} parent=1 // pred_check
      _
    $region19: #{tpu_custom_call.1} parent=1 // pred_check_branch
      %233 = sbr.rel (0) target = $region21
    $region20: #{tpu_custom_call.1} parent=1 // pred_region
      %234 = dma.done [#allocation3], 128
    $region21: #{tpu_custom_call.1} parent=1 // pred_fallthru
      _
    %235 = vsyncpa [#allocation3], 1

</llo_original>
